<compile_context>
chip_gen: v6e
topology: v6e:2x2x1
jax: 0.10.0
libtpu: 0.0.40
codegen_flags: <defaults>
</compile_context>

<pallas_src>
import jax
import jax.numpy as jnp
from jax.experimental import pallas as pl
from jax.experimental.pallas import tpu as pltpu


# ----------------------------- kernels --------------------------------------


def _dense_kernel_single_k(x_ref, w_ref, b_ref, o_ref):
    # Whole K fits one tile: no accumulator phases, write result directly.
    acc = jnp.dot(x_ref[...], w_ref[...], preferred_element_type=jnp.float32)
    o_ref[...] = (acc + b_ref[...]).astype(o_ref.dtype)


def _dense_kernel_multi_k_f32out(x_ref, w_ref, b_ref, o_ref):
    # f32 output: accumulate directly into the resident output block.
    k = pl.program_id(2)

    @pl.when(k == 0)
    def _():
        o_ref[...] = jnp.zeros_like(o_ref)

    o_ref[...] += jnp.dot(x_ref[...], w_ref[...],
                          preferred_element_type=jnp.float32)

    @pl.when(k == pl.num_programs(2) - 1)
    def _():
        o_ref[...] = o_ref[...] + b_ref[...]


def _dense_kernel_multi_k_acc(x_ref, w_ref, b_ref, o_ref, acc_ref):
    # Non-f32 output: keep a f32 VMEM accumulator, cast on finalize.
    k = pl.program_id(2)

    @pl.when(k == 0)
    def _():
        acc_ref[...] = jnp.zeros_like(acc_ref)

    acc_ref[...] += jnp.dot(x_ref[...], w_ref[...],
                            preferred_element_type=jnp.float32)

    @pl.when(k == pl.num_programs(2) - 1)
    def _():
        o_ref[...] = (acc_ref[...] + b_ref[...]).astype(o_ref.dtype)


# --------------------------- tiling / config --------------------------------


def _round_up(v, m):
    return ((v + m - 1) // m) * m


def _vmem_limit_bytes():
    """~75% of per-core VMEM (48 MiB on v7x, 96 MiB on v5e/v6e)."""
    try:
        cap = pltpu.get_tpu_info().vmem_capacity_bytes
    except Exception:
        cap = 64 * 1024 * 1024  # conservative (v7x-sized) fallback
    return int(min(cap * 3 // 4, 112 * 1024 * 1024))


def _choose_tiles(batch, in_features, out_features, compute_dtype):
    sub = 16 if compute_dtype == jnp.bfloat16 else 8
    if compute_dtype == jnp.bfloat16:
        tm0, tn0, tk0 = 1024, 1024, 1024
    else:
        tm0, tn0, tk0 = 512, 512, 1024

    tm = min(tm0, _round_up(batch, sub))
    tn = min(tn0, _round_up(out_features, 128))
    tk = min(tk0, _round_up(in_features, 128))

    # v7x has 2 TensorCores: if M collapses to one tile, make sure the N
    # ("parallel") axis gets at least 2 tiles so work splits across cores.
    np_min = _round_up(out_features, 128)
    if _round_up(batch, sub) <= tm and np_min // tn < 2 and np_min >= 256:
        tn = max(128, _round_up(np_min // 2, 128))

    # Keep the double-buffered working set within the scoped-VMEM budget.
    budget = _vmem_limit_bytes()
    isz = jnp.dtype(compute_dtype).itemsize

    def footprint(tk_):
        return (2 * (tm * tk_ + tk_ * tn) * isz   # double-buffered x / W blocks
                + 2 * tn * 4                      # bias
                + 2 * tm * tn * 4                 # output block
                + tm * tn * 4)                    # f32 accumulator (worst case)

    while footprint(tk) > budget and tk > 128:
        tk = max(128, tk // 2)
    return tm, tn, tk


def prepare_dense_params(weight, bias, *, tn, tk, compute_dtype):
    """One-time (load-time) parameter prep: pad to tile multiples and
    transpose W to (K, N) so the kernel gets the MXU's native K-major feed.
    In a real model this is hoisted out of the per-step forward path."""
    out_features, in_features = weight.shape
    np_ = _round_up(out_features, tn)
    kp = _round_up(in_features, tk)
    w_kn = jnp.pad(weight, ((0, np_ - out_features), (0, kp - in_features)))
    w_kn = w_kn.T.astype(compute_dtype)                       # (Kp, Np)
    b2 = jnp.pad(bias.astype(jnp.float32), (0, np_ - out_features))
    b2 = b2.reshape(1, np_)                                   # f32 bias row
    return w_kn, b2


# ------------------------------ forward -------------------------------------


def dense_forward(x, weight, bias, *, compute_dtype=None, tiles=None):
    """y = x @ weight.T + bias  (matches torch.nn.Linear.forward).

    x:      (B, in_features)
    weight: (out_features, in_features)  -- native PyTorch layout
    bias:   (out_features,)
    compute_dtype: dtype fed to the MXU (e.g. jnp.bfloat16); accumulation and
                   bias add stay f32. Defaults to x.dtype.
    """
    batch, in_features = x.shape
    out_features = weight.shape[0]
    out_dtype = x.dtype
    cdt = jnp.dtype(compute_dtype) if compute_dtype is not None else jnp.dtype(x.dtype)

    if tiles is not None:
        tm, tn, tk = tiles
    else:
        tm, tn, tk = _choose_tiles(batch, in_features, out_features, cdt)

    # Load-time-style weight/bias prep (pad + transpose once).
    w_kn, b2 = prepare_dense_params(weight, bias, tn=tn, tk=tk, compute_dtype=cdt)
    kp, np_ = w_kn.shape

    mp = _round_up(batch, tm)
    xp = jnp.pad(x, ((0, mp - batch), (0, kp - in_features))).astype(cdt)

    nm, nn, nk = mp // tm, np_ // tn, kp // tk
    vmem_limit = _vmem_limit_bytes()

    cdt_isz = jnp.dtype(cdt).itemsize
    out_isz = jnp.dtype(out_dtype).itemsize
    cost = pl.CostEstimate(
        flops=2 * mp * kp * np_,
        bytes_accessed=(mp * kp * cdt_isz * nn        # x re-read per N tile
                        + kp * np_ * cdt_isz * nm     # W re-read per M tile
                        + np_ * 4 * nm                # bias
                        + mp * np_ * out_isz),        # output write
        transcendentals=0,
    )

    if nk == 1:
        # Single-K fast path: no accumulator, no init/finalize phases.
        out = pl.pallas_call(
            _dense_kernel_single_k,
            out_shape=jax.ShapeDtypeStruct((mp, np_), out_dtype),
            grid_spec=pltpu.PrefetchScalarGridSpec(
                num_scalar_prefetch=0,
                grid=(nm, nn),
                in_specs=[
                    pl.BlockSpec((tm, tk), lambda i, j: (i, 0)),   # x
                    pl.BlockSpec((tk, tn), lambda i, j: (0, j)),   # W (K, N)
                    pl.BlockSpec((1, tn), lambda i, j: (0, j)),    # bias (f32)
                ],
                out_specs=pl.BlockSpec((tm, tn), lambda i, j: (i, j)),
            ),
            compiler_params=pltpu.CompilerParams(
                dimension_semantics=("parallel", "parallel"),
                vmem_limit_bytes=vmem_limit,
            ),
            cost_estimate=cost,
        )(xp, w_kn, b2)
    else:
        if out_dtype == jnp.float32:
            kernel = _dense_kernel_multi_k_f32out
            scratch = []
        else:
            kernel = _dense_kernel_multi_k_acc
            scratch = [pltpu.VMEM((tm, tn), jnp.float32)]
        out = pl.pallas_call(
            kernel,
            out_shape=jax.ShapeDtypeStruct((mp, np_), out_dtype),
            grid_spec=pltpu.PrefetchScalarGridSpec(
                num_scalar_prefetch=0,
                grid=(nm, nn, nk),
                in_specs=[
                    pl.BlockSpec((tm, tk), lambda i, j, k: (i, k)),   # x
                    pl.BlockSpec((tk, tn), lambda i, j, k: (k, j)),   # W (K, N)
                    pl.BlockSpec((1, tn), lambda i, j, k: (0, j)),    # bias
                ],
                out_specs=pl.BlockSpec((tm, tn), lambda i, j, k: (i, j)),
                scratch_shapes=scratch,
            ),
            compiler_params=pltpu.CompilerParams(
                dimension_semantics=("parallel", "parallel", "arbitrary"),
                vmem_limit_bytes=vmem_limit,
            ),
            cost_estimate=cost,
        )(xp, w_kn, b2)

    return out[:batch, :out_features]


# ------------------------------- test ---------------------------------------


if __name__ == "__main__":
    key = jax.random.PRNGKey(0)
    kx, kw, kb = jax.random.split(key, 3)

    # Shapes consistent with _Dense: batch=8, in_features=32, out_features=64.
    B, IN, OUT = 8, 32, 64
    x = jax.random.normal(kx, (B, IN), dtype=jnp.float32)
    weight = jax.random.normal(kw, (OUT, IN), dtype=jnp.float32) * 0.05
    bias = jax.random.normal(kb, (OUT,), dtype=jnp.float32) * 0.05

    # 1) f32, auto tiles (single-K fast path).
    y = dense_forward(x, weight, bias)
    jax.block_until_ready(y)
    y_ref = x @ weight.T + bias
    assert y.shape == (B, OUT)
    assert jnp.allclose(y, y_ref, atol=1e-5, rtol=1e-5)

    # 2) f32, forced small tiles so the K-accumulator (multi-K) path runs.
    B2, IN2, OUT2 = 16, 256, 192
    x2 = jax.random.normal(kx, (B2, IN2), dtype=jnp.float32)
    w2 = jax.random.normal(kw, (OUT2, IN2), dtype=jnp.float32) * 0.05
    b2 = jax.random.normal(kb, (OUT2,), dtype=jnp.float32) * 0.05
    y2 = dense_forward(x2, w2, b2, tiles=(8, 128, 128))
    jax.block_until_ready(y2)
    y2_ref = x2 @ w2.T + b2
    assert jnp.allclose(y2, y2_ref, atol=1e-4, rtol=1e-4)

    # 3) bf16 MXU feed with f32 accumulation / f32 output (multi-K).
    y3 = dense_forward(x2, w2, b2, compute_dtype=jnp.bfloat16,
                       tiles=(16, 128, 128))
    jax.block_until_ready(y3)
    assert jnp.allclose(y3, y2_ref, atol=8e-2, rtol=8e-2)

    # 4) bf16 inputs & bf16 output (multi-K, f32 scratch-accumulator path).
    y4 = dense_forward(x2.astype(jnp.bfloat16), w2.astype(jnp.bfloat16),
                       b2.astype(jnp.bfloat16), tiles=(16, 128, 128))
    jax.block_until_ready(y4)
    assert jnp.allclose(y4.astype(jnp.float32), y2_ref, atol=1e-1, rtol=1e-1)

    print("KERNEL_OK")
</pallas_src>

<mosaic_0001>
module attributes {stable_mosaic.version = 11 : i64} {
  func.func @_dense_kernel_single_k(%arg0: i32, %arg1: i32, %arg2: memref<8x128xf32, #tpu.memory_space<vmem>>, %arg3: memref<128x128xf32, #tpu.memory_space<vmem>>, %arg4: memref<1x128xf32, #tpu.memory_space<vmem>>, %arg5: memref<8x128xf32, #tpu.memory_space<vmem>>) attributes {dimension_semantics = [#tpu.dimension_semantics<parallel>, #tpu.dimension_semantics<parallel>], iteration_bounds = array<i64: 1, 1>, scalar_prefetch = 0 : i64, scratch_operands = 0 : i64, tpu.core_type = #tpu.core_type<tc>, window_params = [{transform_indices = @transform_0, window_bounds = array<i64: 8, 128>}, {transform_indices = @transform_1, window_bounds = array<i64: 128, 128>}, {transform_indices = @transform_2, window_bounds = array<i64: 1, 128>}, {transform_indices = @transform_3, window_bounds = array<i64: 8, 128>}]} {
    %c0 = arith.constant 0 : index
    %c0_0 = arith.constant 0 : index
    %0 = vector.load %arg2[%c0, %c0_0] : memref<8x128xf32, #tpu.memory_space<vmem>>, vector<8x128xf32>
    %c0_1 = arith.constant 0 : index
    %c0_2 = arith.constant 0 : index
    %1 = vector.load %arg3[%c0_1, %c0_2] : memref<128x128xf32, #tpu.memory_space<vmem>>, vector<128x128xf32>
    %cst = arith.constant dense<0.000000e+00> : vector<8x128xf32>
    %2 = tpu.matmul %0, %1, %cst {dimension_numbers = #tpu.dot_dimension_numbers<[1], [0], [0], [1], [0, 0, 1, 1], [], []>} : vector<8x128xf32>, vector<128x128xf32>, vector<8x128xf32> -> vector<8x128xf32>
    %c0_3 = arith.constant 0 : index
    %c0_4 = arith.constant 0 : index
    %3 = vector.load %arg4[%c0_3, %c0_4] : memref<1x128xf32, #tpu.memory_space<vmem>>, vector<1x128xf32>
    %4 = vector.broadcast %3 : vector<1x128xf32> to vector<8x128xf32>
    %5 = arith.addf %2, %4 : vector<8x128xf32>
    %c0_5 = arith.constant 0 : index
    %c0_6 = arith.constant 0 : index
    %6 = vector.load %arg5[%c0_5, %c0_6] : memref<8x128xf32, #tpu.memory_space<vmem>>, vector<8x128xf32>
    tpu.vector_store %arg5[%c0_5, %c0_6], %5 {strides = array<i32>} : memref<8x128xf32, #tpu.memory_space<vmem>>, vector<8x128xf32>,
    return
  }
  func.func @transform_0(%arg0: i32, %arg1: i32) -> (i32, i32) {
    %c0_i32 = arith.constant 0 : i32
    %c0_i32_0 = arith.constant 0 : i32
    return %arg0, %c0_i32 : i32, i32
  }
  func.func @transform_1(%arg0: i32, %arg1: i32) -> (i32, i32) {
    %c0_i32 = arith.constant 0 : i32
    %c0_i32_0 = arith.constant 0 : i32
    return %c0_i32, %arg1 : i32, i32
  }
  func.func @transform_2(%arg0: i32, %arg1: i32) -> (i32, i32) {
    %c0_i32 = arith.constant 0 : i32
    %c0_i32_0 = arith.constant 0 : i32
    return %c0_i32, %arg1 : i32, i32
  }
  func.func @transform_3(%arg0: i32, %arg1: i32) -> (i32, i32) {
    %c0_i32 = arith.constant 0 : i32
    return %arg0, %arg1 : i32, i32
  }
}

</mosaic_0001>

<llo_original>
// kernel: tpu_custom_call.1
$region0: #{tpu_custom_call.1}
  #allocation0 [shape = 'u32[]', space=smem, size = 0x4, offset = 0x4, fixed_abs, tag = 'smem constant byte address 0x4 - core index']
  #allocation1 [shape = 'u32[144,128]{1,0:T(1,128)}', space=vmem, size = 0x12000, scoped, tag = 'internal scratch']
  %s0 = inlined_call_operand.hbm [shape: f32[8,128], index: 0, kind: input, shape index: {}]
  %s1 = inlined_call_operand.hbm [shape: f32[128,128], index: 1, kind: input, shape index: {}]
  %s2 = inlined_call_operand.vmem [shape: f32[1,128], index: 2, kind: input, shape index: {}]
  %s3 = inlined_call_operand.hbm [shape: f32[8,128], index: 3, kind: output, shape index: {}]
  %s4 = sld [smem:[#allocation0]]
  $region30: #{tpu_custom_call.1} parent=0
    _
  %s6 = ssub.s32 1, %s4
  %s7 = scalar_select 0, %s6, %s4
  $region1: #{tpu_custom_call.1} parent=0
    #allocation2 [shape = 'u8[4096]{0}', space=vmem, size = 0x1000, scoped, tag = 'input window, operand 0, single buffered']
    #allocation3 [shape = 's32[1]{0}', space=sflag, size = 0x4, scoped, tag = 'scoped memory for tpu_custom_call.1']
    #allocation4 [shape = 's32[1]{0}', space=sflag, size = 0x4, scoped, tag = 'scoped memory for tpu_custom_call.1']
    #allocation5 [shape = 'u8[65536]{0}', space=vmem, size = 0x10000, scoped, tag = 'input window, operand 1, single buffered']
    #allocation6 [shape = 's32[1]{0}', space=sflag, size = 0x4, scoped, tag = 'scoped memory for tpu_custom_call.1']
    #allocation7 [shape = 'u8[4096]{0}', space=vmem, size = 0x1000, scoped, tag = 'output window, operand 0, single buffered']
    %8 = vsyncpa [#allocation3], 0
    %9 = vsyncpa [#allocation6], 0
    %10 = vsyncpa [#allocation4], 0
    // Predicated region
    $region2: #{tpu_custom_call.1} parent=1 // pred_check
      _
    $region3: #{tpu_custom_call.1} parent=1 // pred_check_branch
      %12 = sbr.rel (0) target = $region5
    $region4: #{tpu_custom_call.1} parent=1 // pred_region
      %s14 = ssub.s32 128, 128
      %15 = vsyncadd [#allocation3], %s14
      %s17 = sshll.u32 [#allocation2], 4
      %s18 = int_to_ptr.vmem [resolvable:$true] %s17
      %20 = dma.hbm_to_vmem [thread:$0]  %s0, 128, %s18, [#allocation3]
    $region5: #{tpu_custom_call.1} parent=1 // pred_fallthru
      _
    // Predicated region
    $region6: #{tpu_custom_call.1} parent=1 // pred_check
      _
    $region7: #{tpu_custom_call.1} parent=1 // pred_check_branch
      %22 = sbr.rel (0) target = $region9
    $region8: #{tpu_custom_call.1} parent=1 // pred_region
      %s24 = ssub.s32 2048, 2048
      %25 = vsyncadd [#allocation6], %s24
      %s26 = sshll.u32 [#allocation5], 4
      %s27 = int_to_ptr.vmem [resolvable:$true] %s26
      %32 = dma.hbm_to_vmem [thread:$0]  %s1, 2048, %s27, [#allocation6], 128, 128, 8
    $region9: #{tpu_custom_call.1} parent=1 // pred_fallthru
      _
    // Predicated region
    $region10: #{tpu_custom_call.1} parent=1 // pred_check
      _
    $region11: #{tpu_custom_call.1} parent=1 // pred_check_branch
      %34 = sbr.rel (0) target = $region13
    $region12: #{tpu_custom_call.1} parent=1 // pred_region
      _
    $region13: #{tpu_custom_call.1} parent=1 // pred_fallthru
      _
    // Predicated region
    $region14: #{tpu_custom_call.1} parent=1 // pred_check
      _
    $region15: #{tpu_custom_call.1} parent=1 // pred_check_branch
      %36 = sbr.rel (0) target = $region17
    $region16: #{tpu_custom_call.1} parent=1 // pred_region
      %37 = dma.done [#allocation3], 128
    $region17: #{tpu_custom_call.1} parent=1 // pred_fallthru
      _
    // Predicated region
    $region18: #{tpu_custom_call.1} parent=1 // pred_check
      _
    $region19: #{tpu_custom_call.1} parent=1 // pred_check_branch
      %39 = sbr.rel (0) target = $region21
    $region20: #{tpu_custom_call.1} parent=1 // pred_region
      %40 = dma.done [#allocation6], 2048
    $region21: #{tpu_custom_call.1} parent=1 // pred_fallthru
      _
    %v41 = vld [vmem:[#allocation2] sm:$0xff]
    %v42 = vld [vmem:[#allocation5] sm:$0xff]
    %v43 = vld [vmem:[#allocation5 + $0x8] sm:$0xff]
    %v44 = vld [vmem:[#allocation5 + $0x10] sm:$0xff]
    %v45 = vld [vmem:[#allocation5 + $0x18] sm:$0xff]
    %v46 = vld [vmem:[#allocation5 + $0x20] sm:$0xff]
    %v47 = vld [vmem:[#allocation5 + $0x28] sm:$0xff]
    %v48 = vld [vmem:[#allocation5 + $0x30] sm:$0xff]
    %v49 = vld [vmem:[#allocation5 + $0x38] sm:$0xff]
    %v50 = vld [vmem:[#allocation5 + $0x40] sm:$0xff]
    %v51 = vld [vmem:[#allocation5 + $0x48] sm:$0xff]
    %v52 = vld [vmem:[#allocation5 + $0x50] sm:$0xff]
    %v53 = vld [vmem:[#allocation5 + $0x58] sm:$0xff]
    %v54 = vld [vmem:[#allocation5 + $0x60] sm:$0xff]
    %v55 = vld [vmem:[#allocation5 + $0x68] sm:$0xff]
    %v56 = vld [vmem:[#allocation5 + $0x70] sm:$0xff]
    %v57 = vld [vmem:[#allocation5 + $0x78] sm:$0xff]
    %v58 = vld [vmem:[%s2] sm:$0x1]
    %v60 = vlaneseq
    %v61 = vshrl.u32 %v60, 7
    %v62 = vsub.s32 0, %v61
    %v63 = vrot.slane %v58, %v62
    %65 = vmatprep.subr.mxu0 0.0
    %66 = vmatpush1.msra.mxu0 %v57
    %67 = vmatprep.subr.mxu0 0.0
    %68 = vmatpush1.msra.mxu0 %v56
    %69 = vmatprep.subr.mxu0 0.0
    %70 = vmatpush1.msra.mxu0 %v55
    %71 = vmatprep.subr.mxu0 0.0
    %72 = vmatpush1.msra.mxu0 %v54
    %73 = vmatprep.subr.mxu0 0.0
    %74 = vmatpush1.msra.mxu0 %v53
    %75 = vmatprep.subr.mxu0 0.0
    %76 = vmatpush1.msra.mxu0 %v52
    %77 = vmatprep.subr.mxu0 0.0
    %78 = vmatpush1.msra.mxu0 %v51
    %79 = vmatprep.subr.mxu0 0.0
    %80 = vmatpush1.msra.mxu0 %v50
    %81 = vmatprep.subr.mxu0 0.0
    %82 = vmatpush1.msra.mxu0 %v49
    %83 = vmatprep.subr.mxu0 0.0
    %84 = vmatpush1.msra.mxu0 %v48
    %85 = vmatprep.subr.mxu0 0.0
    %86 = vmatpush1.msra.mxu0 %v47
    %87 = vmatprep.subr.mxu0 0.0
    %88 = vmatpush1.msra.mxu0 %v46
    %89 = vmatprep.subr.mxu0 0.0
    %90 = vmatpush1.msra.mxu0 %v45
    %91 = vmatprep.subr.mxu0 0.0
    %92 = vmatpush1.msra.mxu0 %v44
    %93 = vmatprep.subr.mxu0 0.0
    %94 = vmatpush1.msra.mxu0 %v43
    %95 = vmatprep.subr.mxu0 0.0
    %96 = vmatpush1.msra.mxu0 %v42
    %97 = vmatprep.subr.mxu0 0.0
    %98 = vmatpush2.msra.mxu0 0.0
    %99 = vmatprep.subr.mxu0 0.0
    %100 = vmatpush2.msra.mxu0 0.0
    %101 = vmatprep.subr.mxu0 0.0
    %102 = vmatpush2.msra.mxu0 0.0
    %103 = vmatprep.subr.mxu0 0.0
    %104 = vmatpush2.msra.mxu0 0.0
    %105 = vmatprep.subr.mxu0 0.0
    %106 = vmatpush2.msra.mxu0 0.0
    %107 = vmatprep.subr.mxu0 0.0
    %108 = vmatpush2.msra.mxu0 0.0
    %109 = vmatprep.subr.mxu0 0.0
    %110 = vmatpush2.msra.mxu0 0.0
    %111 = vmatprep.subr.mxu0 0.0
    %112 = vmatpush2.msra.mxu0 0.0
    %113 = vmatprep.subr.mxu0 0.0
    %114 = vmatpush2.msra.mxu0 0.0
    %115 = vmatprep.subr.mxu0 0.0
    %116 = vmatpush2.msra.mxu0 0.0
    %117 = vmatprep.subr.mxu0 0.0
    %118 = vmatpush2.msra.mxu0 0.0
    %119 = vmatprep.subr.mxu0 0.0
    %120 = vmatpush2.msra.mxu0 0.0
    %121 = vmatprep.subr.mxu0 0.0
    %122 = vmatpush2.msra.mxu0 0.0
    %123 = vmatprep.subr.mxu0 0.0
    %124 = vmatpush2.msra.mxu0 0.0
    %125 = vmatprep.subr.mxu0 0.0
    %126 = vmatpush2.msra.mxu0 0.0
    %127 = vmatprep.subr.mxu0 0.0
    %128 = vmatpush2.msra.mxu0 0.0
    %129 = vmatprep.mubr.f32.mxu0 0.0
    %130 = vmatmul.mubr.f32.gmra.mxu0 %v41
    %v131 = vpop.f32.mrf.mxu0
    %v132 = vadd.f32 %v63, %v131
    %v133 = vpop.f32.mrf.mxu0
    %134 = vdwg.mxu0
    %135 = vst [vmem:[#allocation7] sm:$0xff] %v132
    // Predicated region
    $region22: #{tpu_custom_call.1} parent=1 // pred_check
      _
    $region23: #{tpu_custom_call.1} parent=1 // pred_check_branch
      %137 = sbr.rel (0) target = $region25
    $region24: #{tpu_custom_call.1} parent=1 // pred_region
      %s139 = ssub.s32 128, 128
      %140 = vsyncadd [#allocation4], %s139
      %s142 = sshll.u32 [#allocation7], 4
      %s143 = int_to_ptr.vmem [resolvable:$true] %s142
      %145 = dma.vmem_to_hbm [thread:$0]  %s143, 128, %s3, [#allocation4]
    $region25: #{tpu_custom_call.1} parent=1 // pred_fallthru
      _
    // Predicated region
    $region26: #{tpu_custom_call.1} parent=1 // pred_check
      _
    $region27: #{tpu_custom_call.1} parent=1 // pred_check_branch
      %147 = sbr.rel (0) target = $region29
    $region28: #{tpu_custom_call.1} parent=1 // pred_region
      %148 = dma.done [#allocation4], 128
    $region29: #{tpu_custom_call.1} parent=1 // pred_fallthru
      _
    %149 = vsyncpa [#allocation3], 1
    %150 = vsyncpa [#allocation6], 1
    %151 = vsyncpa [#allocation4], 1

</llo_original>
